<compile_context>
chip_gen: v6e
topology: v6e:2x2x1
jax: 0.10.0
libtpu: 0.0.40
codegen_flags: <defaults>
</compile_context>

<pallas_src>
import jax
import jax.numpy as jnp
from jax import lax
from jax.experimental import pallas as pl
from jax.experimental.pallas import tpu as pltpu

BERT_DIM = 768
ITEM_DIM = 5
ITEM_PAD = 8                     # items padded to 8 lanes (lane 5 = constant 1 -> b1)
HIDDEN = 128
HEAD_HIDDEN = 64
N_ACTIONS = 4
OUT_PAD = 8                      # [probs(4) | value(1) | zeros(3)]
LN_EPS = 1e-5                    # PyTorch nn.LayerNorm default

# slab row layout (f32, shape [8, 128]):
#   0: g1   1: bt1
#   2: bias_h  = [ba1 | bc1]   3: gamma_h = [ga1 | gc1]   4: beta_h = [bta1 | btc1]
#   5: bias2   = [ba2(4), bc2(1), 0...]    rows 6-7: padding
ROW_G1, ROW_BT1, ROW_BH, ROW_GH, ROW_BETAH, ROW_B2 = 0, 1, 2, 3, 4, 5


def _round_up(x, m):
    return (x + m - 1) // m * m


def actor_critic_kernel(
    cls_ref,     # [bt, 768] f32/bf16  DistilBERT [CLS] embeddings (cast in-kernel)
    items_ref,   # [bt, 8]   bf16      items (5) | 1.0 bias lane | zeros
    w1b_ref,     # [768,128] bf16      feature_combiner weight (BERT part)
    w1i_ref,     # [8, 128]  bf16      feature_combiner weight (items part) + b1 row
    slab_ref,    # [8, 128]  f32       packed bias / LayerNorm params
    wh_ref,      # [128,128] bf16      [wa1 | wc1] fused hidden weight
    phalf_ref,   # [128,128] bf16      block-diag per-half averaging matrix (1/64)
    w2_ref,      # [128, 8]  bf16      block-diag [wa2 ; wc2] fused output weight
    out_ref,     # [bt, 8]   bf16      [softmax probs(4) | value(1) | zeros(3)]
):
    slab = slab_ref[...]
    g1      = slab[ROW_G1:ROW_G1 + 1, :]
    bt1     = slab[ROW_BT1:ROW_BT1 + 1, :]
    bias_h  = slab[ROW_BH:ROW_BH + 1, :]
    gamma_h = slab[ROW_GH:ROW_GH + 1, :]
    beta_h  = slab[ROW_BETAH:ROW_BETAH + 1, :]
    bias2   = slab[ROW_B2:ROW_B2 + 1, :OUT_PAD]

    # ---- feature_combiner: Linear(773->128) as an aligned K=768 bf16 GEMM plus
    #      a tiny K=8 bf16 side contraction whose constant-1 lane folds in b1.
    x = cls_ref[...].astype(jnp.bfloat16)
    h1 = jnp.dot(x, w1b_ref[...], preferred_element_type=jnp.float32)
    h1 = h1 + jnp.dot(items_ref[...], w1i_ref[...],
                      preferred_element_type=jnp.float32)
    h1 = jnp.maximum(h1, 0.0)

    # LayerNorm(128): exact f32 reductions (only two cross-lane reduces).
    mu1 = jnp.mean(h1, axis=-1, keepdims=True)
    d1 = h1 - mu1
    var1 = jnp.mean(d1 * d1, axis=-1, keepdims=True)
    feat = d1 * lax.rsqrt(var1 + LN_EPS) * g1 + bt1          # [bt, 128] f32

    # ---- fused actor/critic hidden: one [128,128] GEMM + ReLU.
    h2 = jnp.dot(feat.astype(jnp.bfloat16), wh_ref[...],
                 preferred_element_type=jnp.float32)
    h2 = jnp.maximum(h2 + bias_h, 0.0)                        # [bt, 128]

    # Per-half LayerNorm(64): half means/vars come out of the MXU via the
    # block-diagonal averaging matrix (already broadcast per half), so no lane
    # masks, selects or XLU reductions contend with the vmatmul slot.
    mu_h = jnp.dot(h2.astype(jnp.bfloat16), phalf_ref[...],
                   preferred_element_type=jnp.float32)
    d = h2 - mu_h
    var_h = jnp.dot((d * d).astype(jnp.bfloat16), phalf_ref[...],
                    preferred_element_type=jnp.float32)
    hn = d * lax.rsqrt(var_h + LN_EPS) * gamma_h + beta_h     # [a_ln | c_ln]

    # ---- fused heads: block-diagonal [128,8] GEMM -> logits(4) + value(1).
    out8 = jnp.dot(hn.astype(jnp.bfloat16), w2_ref[...],
                   preferred_element_type=jnp.float32) + bias2   # [bt, 8]

    lane8 = lax.broadcasted_iota(jnp.int32, out8.shape, 1)
    is_logit = lane8 < N_ACTIONS
    masked = jnp.where(is_logit, out8, -jnp.inf)
    m = jnp.max(masked, axis=-1, keepdims=True)
    e = jnp.where(is_logit, jnp.exp(masked - m), 0.0)
    probs = e / jnp.sum(e, axis=-1, keepdims=True)            # exact normalization
    value = jnp.where(lane8 == N_ACTIONS, out8, 0.0)
    out_ref[...] = jnp.where(is_logit, probs, value).astype(out_ref.dtype)


def init_params(key):
    """Deterministic parameter init matching the PyTorch layer shapes."""
    ks = jax.random.split(key, 8)

    def lin(k, fan_in, fan_out):
        bound = 1.0 / jnp.sqrt(fan_in)
        kw, kb = jax.random.split(k)
        w = jax.random.uniform(kw, (fan_in, fan_out), jnp.float32, -bound, bound)
        b = jax.random.uniform(kb, (1, fan_out), jnp.float32, -bound, bound)
        return w, b

    p = {}
    p["w1"], p["b1"] = lin(ks[0], BERT_DIM + ITEM_DIM, HIDDEN)
    p["g1"] = jnp.ones((1, HIDDEN), jnp.float32)
    p["bt1"] = jnp.zeros((1, HIDDEN), jnp.float32)

    p["wa1"], p["ba1"] = lin(ks[1], HIDDEN, HEAD_HIDDEN)
    p["ga1"] = jnp.ones((1, HEAD_HIDDEN), jnp.float32)
    p["bta1"] = jnp.zeros((1, HEAD_HIDDEN), jnp.float32)
    p["wa2"], p["ba2"] = lin(ks[2], HEAD_HIDDEN, N_ACTIONS)

    p["wc1"], p["bc1"] = lin(ks[3], HIDDEN, HEAD_HIDDEN)
    p["gc1"] = jnp.ones((1, HEAD_HIDDEN), jnp.float32)
    p["btc1"] = jnp.zeros((1, HEAD_HIDDEN), jnp.float32)
    p["wc2"], p["bc2"] = lin(ks[4], HEAD_HIDDEN, 1)
    return p


def pack_params(p):
    """Pack logical (PyTorch-shaped, transposed) params into kernel layout."""
    w1b = p["w1"][:BERT_DIM].astype(jnp.bfloat16)                     # [768,128]

    w1i = jnp.zeros((ITEM_PAD, HIDDEN), jnp.float32)
    w1i = w1i.at[:ITEM_DIM].set(p["w1"][BERT_DIM:])
    w1i = w1i.at[ITEM_DIM].set(p["b1"][0])       # bias row (items lane 5 == 1.0)
    w1i = w1i.astype(jnp.bfloat16)                                    # [8,128]

    slab = jnp.zeros((8, HIDDEN), jnp.float32)
    slab = slab.at[ROW_G1].set(p["g1"][0])
    slab = slab.at[ROW_BT1].set(p["bt1"][0])
    slab = slab.at[ROW_BH].set(jnp.concatenate([p["ba1"][0], p["bc1"][0]]))
    slab = slab.at[ROW_GH].set(jnp.concatenate([p["ga1"][0], p["gc1"][0]]))
    slab = slab.at[ROW_BETAH].set(jnp.concatenate([p["bta1"][0], p["btc1"][0]]))
    bias2 = jnp.zeros((HIDDEN,), jnp.float32)
    bias2 = bias2.at[:N_ACTIONS].set(p["ba2"][0]).at[N_ACTIONS].set(p["bc2"][0, 0])
    slab = slab.at[ROW_B2].set(bias2)

    wh = jnp.concatenate([p["wa1"], p["wc1"]], axis=1).astype(jnp.bfloat16)

    # Block-diagonal per-half averaging matrix (1/64 is exact in bf16).
    phalf = jnp.zeros((HIDDEN, HIDDEN), jnp.float32)
    phalf = phalf.at[:HEAD_HIDDEN, :HEAD_HIDDEN].set(1.0 / HEAD_HIDDEN)
    phalf = phalf.at[HEAD_HIDDEN:, HEAD_HIDDEN:].set(1.0 / HEAD_HIDDEN)
    phalf = phalf.astype(jnp.bfloat16)                                # [128,128]

    w2 = jnp.zeros((HIDDEN, OUT_PAD), jnp.float32)
    w2 = w2.at[:HEAD_HIDDEN, :N_ACTIONS].set(p["wa2"])
    w2 = w2.at[HEAD_HIDDEN:, N_ACTIONS:N_ACTIONS + 1].set(p["wc2"])
    w2 = w2.astype(jnp.bfloat16)                                      # [128,8]
    return dict(w1b=w1b, w1i=w1i, slab=slab, wh=wh, phalf=phalf, w2=w2)


def _choose_tiling(B, b_tile, max_tile):
    """Pick (b_tile, B_pad): 16-aligned tiles, minimal padding, even block
    count when there is more than one block (so both v7x TensorCores work)."""
    B16 = _round_up(B, 16)
    if b_tile is not None:
        bt = max(16, _round_up(b_tile, 16))
        return bt, _round_up(B16, bt)
    if B16 <= max_tile:
        if B16 % 32 == 0 and B16 >= 512:
            return B16 // 2, B16          # 2 even blocks, zero extra padding
        return B16, B16                   # single tile == whole 16-aligned batch
    n_blocks = -(-B16 // max_tile)
    if n_blocks % 2:
        n_blocks += 1                     # even block count for v7x megacore
    bt = _round_up(-(-B16 // n_blocks), 16)
    return bt, n_blocks * bt


def actor_critic_forward(cls_emb, items, packed, *, b_tile=None, max_tile=2048):
    """cls_emb: [B, 768] (DistilBERT [CLS] output, f32 or bf16), items: [B, 5]."""
    B = cls_emb.shape[0]
    b_tile, B_pad = _choose_tiling(B, b_tile, max_tile)
    n_blocks = B_pad // b_tile

    # cls streams into the kernel in its producer dtype (cast to bf16 in-kernel);
    # only pad when the batch is not tile-aligned.
    cls_in = cls_emb if B_pad == B else jnp.pad(cls_emb, ((0, B_pad - B), (0, 0)))

    items_p = jnp.zeros((B_pad, ITEM_PAD), jnp.bfloat16)
    items_p = items_p.at[:B, :ITEM_DIM].set(items.astype(jnp.bfloat16))
    items_p = items_p.at[:, ITEM_DIM].set(1.0)   # constant-1 bias lane -> folds b1

    batch = lambda i: (i, 0)   # activation / output tiles walk the batch
    const = lambda i: (0, 0)   # weights stay VMEM-resident across grid steps

    flops = 2 * B_pad * (BERT_DIM * HIDDEN + ITEM_PAD * HIDDEN
                         + 3 * HIDDEN * HIDDEN + HIDDEN * OUT_PAD)
    bytes_w = (BERT_DIM * HIDDEN * 2 + ITEM_PAD * HIDDEN * 2 + 8 * HIDDEN * 4
               + 2 * HIDDEN * HIDDEN * 2 + HIDDEN * OUT_PAD * 2)
    bytes_io = (B_pad * BERT_DIM * cls_in.dtype.itemsize
                + B_pad * (ITEM_PAD * 2 + OUT_PAD * 2))

    out = pl.pallas_call(
        actor_critic_kernel,
        out_shape=jax.ShapeDtypeStruct((B_pad, OUT_PAD), jnp.bfloat16),
        grid_spec=pltpu.PrefetchScalarGridSpec(
            num_scalar_prefetch=0,
            grid=(n_blocks,),
            in_specs=[
                pl.BlockSpec((b_tile, BERT_DIM), batch),
                pl.BlockSpec((b_tile, ITEM_PAD), batch),
                pl.BlockSpec((BERT_DIM, HIDDEN), const),
                pl.BlockSpec((ITEM_PAD, HIDDEN), const),
                pl.BlockSpec((8, HIDDEN), const),
                pl.BlockSpec((HIDDEN, HIDDEN), const),
                pl.BlockSpec((HIDDEN, HIDDEN), const),
                pl.BlockSpec((HIDDEN, OUT_PAD), const),
            ],
            out_specs=pl.BlockSpec((b_tile, OUT_PAD), batch),
        ),
        compiler_params=pltpu.CompilerParams(
            dimension_semantics=("parallel",),       # v7x: split batch over 2 TCs
            vmem_limit_bytes=32 * 1024 * 1024,       # safe on v5e/v6e/v7x
        ),
        cost_estimate=pl.CostEstimate(
            flops=flops,
            transcendentals=12 * B_pad,
            bytes_accessed=bytes_w + bytes_io,
        ),
    )(cls_in, items_p, packed["w1b"], packed["w1i"], packed["slab"],
      packed["wh"], packed["phalf"], packed["w2"])

    probs = out[:B, :N_ACTIONS].astype(jnp.float32)
    value = out[:B, N_ACTIONS:N_ACTIONS + 1].astype(jnp.float32)
    return probs, value


def reference_forward(cls_emb, items, p):
    """Plain-JAX reference: bf16 MXU inputs for the GEMMs (inherent to the
    kernel design) but exact f32 LayerNorms and exact softmax."""
    def bdot(x, w):
        return jnp.dot(x.astype(jnp.bfloat16), w.astype(jnp.bfloat16),
                       preferred_element_type=jnp.float32)

    def ln(h, g, b):
        mu = jnp.mean(h, -1, keepdims=True)
        var = jnp.mean((h - mu) ** 2, -1, keepdims=True)
        return (h - mu) * lax.rsqrt(var + LN_EPS) * g + b

    h1 = (bdot(cls_emb, p["w1"][:BERT_DIM])
          + bdot(items, p["w1"][BERT_DIM:]) + p["b1"])
    feat = ln(jnp.maximum(h1, 0.0), p["g1"], p["bt1"])
    a = ln(jnp.maximum(bdot(feat, p["wa1"]) + p["ba1"], 0.0), p["ga1"], p["bta1"])
    probs = jax.nn.softmax(bdot(a, p["wa2"]) + p["ba2"], axis=-1)
    c = ln(jnp.maximum(bdot(feat, p["wc1"]) + p["bc1"], 0.0), p["gc1"], p["btc1"])
    value = bdot(c, p["wc2"]) + p["bc2"]
    return probs, value


if __name__ == "__main__":
    key = jax.random.PRNGKey(0)
    k_param, k_bert, k_items, k_stats = jax.random.split(key, 4)

    B = 16   # multiple of 16 -> zero-copy cls path (no host-side pad/cast)
    params = init_params(k_param)
    packed = pack_params(params)
    # Stand-in for DistilBERT [CLS] embeddings (see TODO above).
    cls_emb = jax.random.normal(k_bert, (B, BERT_DIM), jnp.float32)
    items = jax.random.normal(k_items, (B, ITEM_DIM), jnp.float32)
    # `stats` is an argument of ActorCritic.forward but is never used there.
    stats = jax.random.normal(k_stats, (B, ITEM_DIM), jnp.float32)  # unused

    probs, value = actor_critic_forward(cls_emb, items, packed)
    jax.block_until_ready((probs, value))

    ref_probs, ref_value = reference_forward(cls_emb, items, params)
    assert probs.shape == (B, N_ACTIONS) and value.shape == (B, 1)
    # Tolerances account for bf16 MXU inputs, MXU-computed per-half LN stats,
    # and the bf16 output store (reference uses exact f32 LayerNorm/softmax).
    assert jnp.allclose(probs, ref_probs, rtol=2e-2, atol=1e-2)
    assert jnp.allclose(value, ref_value, rtol=3e-2, atol=1.5e-2)
    assert jnp.allclose(jnp.sum(probs, axis=-1), 1.0, atol=1e-2)
    assert bool(jnp.all(jnp.isfinite(probs))) and bool(jnp.all(jnp.isfinite(value)))

    print("KERNEL_OK")
</pallas_src>

<mosaic_0001>
module attributes {stable_mosaic.version = 11 : i64} {
  func.func @actor_critic_kernel(%arg0: i32, %arg1: memref<16x768xf32, #tpu.memory_space<vmem>>, %arg2: memref<16x8xbf16, #tpu.memory_space<vmem>>, %arg3: memref<768x128xbf16, #tpu.memory_space<vmem>>, %arg4: memref<8x128xbf16, #tpu.memory_space<vmem>>, %arg5: memref<8x128xf32, #tpu.memory_space<vmem>>, %arg6: memref<128x128xbf16, #tpu.memory_space<vmem>>, %arg7: memref<128x128xbf16, #tpu.memory_space<vmem>>, %arg8: memref<128x8xbf16, #tpu.memory_space<vmem>>, %arg9: memref<16x8xbf16, #tpu.memory_space<vmem>>) attributes {dimension_semantics = [#tpu.dimension_semantics<parallel>], iteration_bounds = array<i64: 1>, scalar_prefetch = 0 : i64, scratch_operands = 0 : i64, tpu.core_type = #tpu.core_type<tc>, window_params = [{transform_indices = @transform_0, window_bounds = array<i64: 16, 768>}, {transform_indices = @transform_1, window_bounds = array<i64: 16, 8>}, {pipeline_mode = #tpu.pipeline_mode<synchronous>, transform_indices = @transform_2, window_bounds = array<i64: 768, 128>}, {pipeline_mode = #tpu.pipeline_mode<synchronous>, transform_indices = @transform_3, window_bounds = array<i64: 8, 128>}, {pipeline_mode = #tpu.pipeline_mode<synchronous>, transform_indices = @transform_4, window_bounds = array<i64: 8, 128>}, {pipeline_mode = #tpu.pipeline_mode<synchronous>, transform_indices = @transform_5, window_bounds = array<i64: 128, 128>}, {pipeline_mode = #tpu.pipeline_mode<synchronous>, transform_indices = @transform_6, window_bounds = array<i64: 128, 128>}, {pipeline_mode = #tpu.pipeline_mode<synchronous>, transform_indices = @transform_7, window_bounds = array<i64: 128, 8>}, {transform_indices = @transform_8, window_bounds = array<i64: 16, 8>}]} {
    %c0 = arith.constant 0 : index
    %c0_0 = arith.constant 0 : index
    %0 = vector.load %arg5[%c0, %c0_0] : memref<8x128xf32, #tpu.memory_space<vmem>>, vector<8x128xf32>
    %1 = vector.extract_strided_slice %0 {offsets = [0, 0], sizes = [1, 128], strides = [1, 1]} : vector<8x128xf32> to vector<1x128xf32>
    %2 = vector.extract_strided_slice %0 {offsets = [1, 0], sizes = [1, 128], strides = [1, 1]} : vector<8x128xf32> to vector<1x128xf32>
    %3 = vector.extract_strided_slice %0 {offsets = [2, 0], sizes = [1, 128], strides = [1, 1]} : vector<8x128xf32> to vector<1x128xf32>
    %4 = vector.extract_strided_slice %0 {offsets = [3, 0], sizes = [1, 128], strides = [1, 1]} : vector<8x128xf32> to vector<1x128xf32>
    %5 = vector.extract_strided_slice %0 {offsets = [4, 0], sizes = [1, 128], strides = [1, 1]} : vector<8x128xf32> to vector<1x128xf32>
    %6 = vector.extract_strided_slice %0 {offsets = [5, 0], sizes = [1, 8], strides = [1, 1]} : vector<8x128xf32> to vector<1x8xf32>
    %c0_1 = arith.constant 0 : index
    %c0_2 = arith.constant 0 : index
    %7 = vector.load %arg1[%c0_1, %c0_2] : memref<16x768xf32, #tpu.memory_space<vmem>>, vector<16x768xf32>
    %8 = arith.truncf %7 : vector<16x768xf32> to vector<16x768xbf16>
    %c0_3 = arith.constant 0 : index
    %c0_4 = arith.constant 0 : index
    %9 = vector.load %arg3[%c0_3, %c0_4] : memref<768x128xbf16, #tpu.memory_space<vmem>>, vector<768x128xbf16>
    %cst = arith.constant dense<0.000000e+00> : vector<16x128xf32>
    %10 = tpu.matmul %8, %9, %cst {dimension_numbers = #tpu.dot_dimension_numbers<[1], [0], [0], [1], [0, 0, 1, 1], [], []>} : vector<16x768xbf16>, vector<768x128xbf16>, vector<16x128xf32> -> vector<16x128xf32>
    %c0_5 = arith.constant 0 : index
    %c0_6 = arith.constant 0 : index
    %11 = vector.load %arg2[%c0_5, %c0_6] : memref<16x8xbf16, #tpu.memory_space<vmem>>, vector<16x8xbf16>
    %c0_7 = arith.constant 0 : index
    %c0_8 = arith.constant 0 : index
    %12 = vector.load %arg4[%c0_7, %c0_8] : memref<8x128xbf16, #tpu.memory_space<vmem>>, vector<8x128xbf16>
    %cst_9 = arith.constant dense<0.000000e+00> : vector<16x128xf32>
    %13 = tpu.matmul %11, %12, %cst_9 {dimension_numbers = #tpu.dot_dimension_numbers<[1], [0], [0], [1], [0, 0, 1, 1], [], []>} : vector<16x8xbf16>, vector<8x128xbf16>, vector<16x128xf32> -> vector<16x128xf32>
    %14 = arith.addf %10, %13 : vector<16x128xf32>
    %cst_10 = arith.constant 0.000000e+00 : f32
    %15 = vector.broadcast %cst_10 : f32 to vector<16x128xf32>
    %16 = arith.maximumf %14, %15 : vector<16x128xf32>
    %cst_11 = arith.constant dense<0.000000e+00> : vector<16xf32>
    %17 = vector.multi_reduction <add>, %16, %cst_11 [1] : vector<16x128xf32> to vector<16xf32>
    %18 = vector.shape_cast %17 : vector<16xf32> to vector<16x1xf32>
    %cst_12 = arith.constant 1.280000e+02 : f32
    %19 = vector.broadcast %cst_12 : f32 to vector<16x1xf32>
    %20 = arith.divf %18, %19 : vector<16x1xf32>
    %21 = vector.broadcast %20 : vector<16x1xf32> to vector<16x128xf32>
    %22 = arith.subf %16, %21 : vector<16x128xf32>
    %23 = arith.mulf %22, %22 : vector<16x128xf32>
    %cst_13 = arith.constant dense<0.000000e+00> : vector<16xf32>
    %24 = vector.multi_reduction <add>, %23, %cst_13 [1] : vector<16x128xf32> to vector<16xf32>
    %25 = vector.shape_cast %24 : vector<16xf32> to vector<16x1xf32>
    %cst_14 = arith.constant 1.280000e+02 : f32
    %26 = vector.broadcast %cst_14 : f32 to vector<16x1xf32>
    %27 = arith.divf %25, %26 : vector<16x1xf32>
    %cst_15 = arith.constant 9.99999974E-6 : f32
    %28 = vector.broadcast %cst_15 : f32 to vector<16x1xf32>
    %29 = arith.addf %27, %28 : vector<16x1xf32>
    %30 = math.rsqrt %29 : vector<16x1xf32>
    %31 = vector.broadcast %30 : vector<16x1xf32> to vector<16x128xf32>
    %32 = arith.mulf %22, %31 : vector<16x128xf32>
    %33 = vector.broadcast %1 : vector<1x128xf32> to vector<16x128xf32>
    %34 = arith.mulf %32, %33 : vector<16x128xf32>
    %35 = vector.broadcast %2 : vector<1x128xf32> to vector<16x128xf32>
    %36 = arith.addf %34, %35 : vector<16x128xf32>
    %37 = arith.truncf %36 : vector<16x128xf32> to vector<16x128xbf16>
    %c0_16 = arith.constant 0 : index
    %c0_17 = arith.constant 0 : index
    %38 = vector.load %arg6[%c0_16, %c0_17] : memref<128x128xbf16, #tpu.memory_space<vmem>>, vector<128x128xbf16>
    %cst_18 = arith.constant dense<0.000000e+00> : vector<16x128xf32>
    %39 = tpu.matmul %37, %38, %cst_18 {dimension_numbers = #tpu.dot_dimension_numbers<[1], [0], [0], [1], [0, 0, 1, 1], [], []>} : vector<16x128xbf16>, vector<128x128xbf16>, vector<16x128xf32> -> vector<16x128xf32>
    %40 = vector.broadcast %3 : vector<1x128xf32> to vector<16x128xf32>
    %41 = arith.addf %39, %40 : vector<16x128xf32>
    %cst_19 = arith.constant 0.000000e+00 : f32
    %42 = vector.broadcast %cst_19 : f32 to vector<16x128xf32>
    %43 = arith.maximumf %41, %42 : vector<16x128xf32>
    %44 = arith.truncf %43 : vector<16x128xf32> to vector<16x128xbf16>
    %c0_20 = arith.constant 0 : index
    %c0_21 = arith.constant 0 : index
    %45 = vector.load %arg7[%c0_20, %c0_21] : memref<128x128xbf16, #tpu.memory_space<vmem>>, vector<128x128xbf16>
    %cst_22 = arith.constant dense<0.000000e+00> : vector<16x128xf32>
    %46 = tpu.matmul %44, %45, %cst_22 {dimension_numbers = #tpu.dot_dimension_numbers<[1], [0], [0], [1], [0, 0, 1, 1], [], []>} : vector<16x128xbf16>, vector<128x128xbf16>, vector<16x128xf32> -> vector<16x128xf32>
    %47 = arith.subf %43, %46 : vector<16x128xf32>
    %48 = arith.mulf %47, %47 : vector<16x128xf32>
    %49 = arith.truncf %48 : vector<16x128xf32> to vector<16x128xbf16>
    %c0_23 = arith.constant 0 : index
    %c0_24 = arith.constant 0 : index
    %50 = vector.load %arg7[%c0_23, %c0_24] : memref<128x128xbf16, #tpu.memory_space<vmem>>, vector<128x128xbf16>
    %cst_25 = arith.constant dense<0.000000e+00> : vector<16x128xf32>
    %51 = tpu.matmul %49, %50, %cst_25 {dimension_numbers = #tpu.dot_dimension_numbers<[1], [0], [0], [1], [0, 0, 1, 1], [], []>} : vector<16x128xbf16>, vector<128x128xbf16>, vector<16x128xf32> -> vector<16x128xf32>
    %cst_26 = arith.constant 9.99999974E-6 : f32
    %52 = vector.broadcast %cst_26 : f32 to vector<16x128xf32>
    %53 = arith.addf %51, %52 : vector<16x128xf32>
    %54 = math.rsqrt %53 : vector<16x128xf32>
    %55 = arith.mulf %47, %54 : vector<16x128xf32>
    %56 = vector.broadcast %4 : vector<1x128xf32> to vector<16x128xf32>
    %57 = arith.mulf %55, %56 : vector<16x128xf32>
    %58 = vector.broadcast %5 : vector<1x128xf32> to vector<16x128xf32>
    %59 = arith.addf %57, %58 : vector<16x128xf32>
    %60 = arith.truncf %59 : vector<16x128xf32> to vector<16x128xbf16>
    %c0_27 = arith.constant 0 : index
    %c0_28 = arith.constant 0 : index
    %61 = vector.load %arg8[%c0_27, %c0_28] : memref<128x8xbf16, #tpu.memory_space<vmem>>, vector<128x8xbf16>
    %cst_29 = arith.constant dense<0.000000e+00> : vector<16x8xf32>
    %62 = tpu.matmul %60, %61, %cst_29 {dimension_numbers = #tpu.dot_dimension_numbers<[1], [0], [0], [1], [0, 0, 1, 1], [], []>} : vector<16x128xbf16>, vector<128x8xbf16>, vector<16x8xf32> -> vector<16x8xf32>
    %63 = vector.broadcast %6 : vector<1x8xf32> to vector<16x8xf32>
    %64 = arith.addf %62, %63 : vector<16x8xf32>
    %65 = tpu.iota {dimensions = array<i32: 1>} : vector<16x8xi32>
    %c4_i32 = arith.constant 4 : i32
    %66 = vector.broadcast %c4_i32 : i32 to vector<16x8xi32>
    %67 = arith.cmpi slt, %65, %66 : vector<16x8xi32>
    %cst_30 = arith.constant 0xFF800000 : f32
    %68 = vector.broadcast %cst_30 : f32 to vector<16x8xf32>
    %69 = arith.select %67, %64, %68 : vector<16x8xi1>, vector<16x8xf32>
    %cst_31 = arith.constant dense<0xFF800000> : vector<16xf32>
    %70 = vector.multi_reduction <maximumf>, %69, %cst_31 [1] : vector<16x8xf32> to vector<16xf32>
    %71 = vector.shape_cast %70 : vector<16xf32> to vector<16x1xf32>
    %72 = vector.broadcast %71 : vector<16x1xf32> to vector<16x8xf32>
    %73 = arith.subf %69, %72 : vector<16x8xf32>
    %74 = math.exp %73 : vector<16x8xf32>
    %cst_32 = arith.constant 0.000000e+00 : f32
    %75 = vector.broadcast %cst_32 : f32 to vector<16x8xf32>
    %76 = arith.select %67, %74, %75 : vector<16x8xi1>, vector<16x8xf32>
    %cst_33 = arith.constant dense<0.000000e+00> : vector<16xf32>
    %77 = vector.multi_reduction <add>, %76, %cst_33 [1] : vector<16x8xf32> to vector<16xf32>
    %78 = vector.shape_cast %77 : vector<16xf32> to vector<16x1xf32>
    %79 = vector.broadcast %78 : vector<16x1xf32> to vector<16x8xf32>
    %80 = arith.divf %76, %79 : vector<16x8xf32>
    %c4_i32_34 = arith.constant 4 : i32
    %81 = vector.broadcast %c4_i32_34 : i32 to vector<16x8xi32>
    %82 = arith.cmpi eq, %65, %81 : vector<16x8xi32>
    %cst_35 = arith.constant 0.000000e+00 : f32
    %83 = vector.broadcast %cst_35 : f32 to vector<16x8xf32>
    %84 = arith.select %82, %64, %83 : vector<16x8xi1>, vector<16x8xf32>
    %85 = arith.select %67, %80, %84 : vector<16x8xi1>, vector<16x8xf32>
    %86 = arith.truncf %85 : vector<16x8xf32> to vector<16x8xbf16>
    %c0_36 = arith.constant 0 : index
    %c0_37 = arith.constant 0 : index
    %87 = vector.load %arg9[%c0_36, %c0_37] : memref<16x8xbf16, #tpu.memory_space<vmem>>, vector<16x8xbf16>
    tpu.vector_store %arg9[%c0_36, %c0_37], %86 {strides = array<i32>} : memref<16x8xbf16, #tpu.memory_space<vmem>>, vector<16x8xbf16>,
    return
  }
  func.func @transform_0(%arg0: i32) -> (i32, i32) {
    %c0_i32 = arith.constant 0 : i32
    %c0_i32_0 = arith.constant 0 : i32
    return %arg0, %c0_i32 : i32, i32
  }
  func.func @transform_1(%arg0: i32) -> (i32, i32) {
    %c0_i32 = arith.constant 0 : i32
    %c0_i32_0 = arith.constant 0 : i32
    return %arg0, %c0_i32 : i32, i32
  }
  func.func @transform_2(%arg0: i32) -> (i32, i32) {
    %c0_i32 = arith.constant 0 : i32
    %c0_i32_0 = arith.constant 0 : i32
    %c0_i32_1 = arith.constant 0 : i32
    return %c0_i32, %c0_i32_0 : i32, i32
  }
  func.func @transform_3(%arg0: i32) -> (i32, i32) {
    %c0_i32 = arith.constant 0 : i32
    %c0_i32_0 = arith.constant 0 : i32
    %c0_i32_1 = arith.constant 0 : i32
    return %c0_i32, %c0_i32_0 : i32, i32
  }
  func.func @transform_4(%arg0: i32) -> (i32, i32) {
    %c0_i32 = arith.constant 0 : i32
    %c0_i32_0 = arith.constant 0 : i32
    %c0_i32_1 = arith.constant 0 : i32
    return %c0_i32, %c0_i32_0 : i32, i32
  }
  func.func @transform_5(%arg0: i32) -> (i32, i32) {
    %c0_i32 = arith.constant 0 : i32
    %c0_i32_0 = arith.constant 0 : i32
    %c0_i32_1 = arith.constant 0 : i32
    return %c0_i32, %c0_i32_0 : i32, i32
  }
  func.func @transform_6(%arg0: i32) -> (i32, i32) {
    %c0_i32 = arith.constant 0 : i32
    %c0_i32_0 = arith.constant 0 : i32
    %c0_i32_1 = arith.constant 0 : i32
    return %c0_i32, %c0_i32_0 : i32, i32
  }
  func.func @transform_7(%arg0: i32) -> (i32, i32) {
    %c0_i32 = arith.constant 0 : i32
    %c0_i32_0 = arith.constant 0 : i32
    %c0_i32_1 = arith.constant 0 : i32
    return %c0_i32, %c0_i32_0 : i32, i32
  }
  func.func @transform_8(%arg0: i32) -> (i32, i32) {
    %c0_i32 = arith.constant 0 : i32
    %c0_i32_0 = arith.constant 0 : i32
    return %arg0, %c0_i32 : i32, i32
  }
}

</mosaic_0001>

<llo_original>
// kernel: tpu_custom_call.1
$region0: #{tpu_custom_call.1}
  #allocation0 [shape = 'u32[]', space=smem, size = 0x4, offset = 0x4, fixed_abs, tag = 'smem constant byte address 0x4 - core index']
  #allocation1 [shape = 'u32[144,128]{1,0:T(1,128)}', space=vmem, size = 0x12000, scoped, tag = 'internal scratch']
  %s0 = inlined_call_operand.hbm [shape: f32[16,768], index: 0, kind: input, shape index: {}]
  %s1 = inlined_call_operand.vmem [shape: bf16[16,8], index: 1, kind: input, shape index: {}]
  %s2 = inlined_call_operand.hbm [shape: bf16[768,128], index: 2, kind: input, shape index: {}]
  %s3 = inlined_call_operand.vmem [shape: bf16[8,128], index: 3, kind: input, shape index: {}]
  %s4 = inlined_call_operand.vmem [shape: f32[8,128], index: 4, kind: input, shape index: {}]
  %s5 = inlined_call_operand.vmem [shape: bf16[128,128], index: 5, kind: input, shape index: {}]
  %s6 = inlined_call_operand.hbm [shape: bf16[128,128], index: 6, kind: input, shape index: {}]
  %s7 = inlined_call_operand.vmem [shape: bf16[128,8], index: 7, kind: input, shape index: {}]
  %s8 = inlined_call_operand.vmem [shape: bf16[16,8], index: 8, kind: output, shape index: {}]
  %s9 = sld [smem:[#allocation0]]
  $region54: #{tpu_custom_call.1} parent=0
    _
  %s11 = ssub.s32 1, %s9
  %s12 = scalar_select 0, %s11, %s9
  $region1: #{tpu_custom_call.1} parent=0
    #allocation2 [shape = 'u8[49152]{0}', space=vmem, size = 0xc000, scoped, tag = 'input window, operand 0, single buffered']
    #allocation3 [shape = 's32[1]{0}', space=sflag, size = 0x4, scoped, tag = 'scoped memory for tpu_custom_call.1']
    #allocation4 [shape = 'u8[196608]{0}', space=vmem, size = 0x30000, scoped, tag = 'input window, operand 2, single buffered']
    #allocation5 [shape = 's32[1]{0}', space=sflag, size = 0x4, scoped, tag = 'scoped memory for tpu_custom_call.1']
    #allocation6 [shape = 'u8[32768]{0}', space=vmem, size = 0x8000, scoped, tag = 'input window, operand 6, single buffered']
    %13 = vsyncpa [#allocation3], 0
    %14 = vsyncpa [#allocation5], 0
    // Predicated region
    $region2: #{tpu_custom_call.1} parent=1 // pred_check
      _
    $region3: #{tpu_custom_call.1} parent=1 // pred_check_branch
      %16 = sbr.rel (0) target = $region5
    $region4: #{tpu_custom_call.1} parent=1 // pred_region
      %s18 = ssub.s32 1536, 1536
      %19 = vsyncadd [#allocation3], %s18
      %s20 = sshll.u32 [#allocation2], 4
      %s21 = int_to_ptr.vmem [resolvable:$true] %s20
      %26 = dma.hbm_to_vmem [thread:$0]  %s0, 1536, %s21, [#allocation3], 768, 768, 48
    $region5: #{tpu_custom_call.1} parent=1 // pred_fallthru
      _
    // Predicated region
    $region6: #{tpu_custom_call.1} parent=1 // pred_check
      _
    $region7: #{tpu_custom_call.1} parent=1 // pred_check_branch
      %28 = sbr.rel (0) target = $region9
    $region8: #{tpu_custom_call.1} parent=1 // pred_region
      _
    $region9: #{tpu_custom_call.1} parent=1 // pred_fallthru
      _
    // Predicated region
    $region10: #{tpu_custom_call.1} parent=1 // pred_check
      _
    $region11: #{tpu_custom_call.1} parent=1 // pred_check_branch
      %30 = sbr.rel (0) target = $region13
    $region12: #{tpu_custom_call.1} parent=1 // pred_region
      %s32 = ssub.s32 6144, 6144
      %33 = vsyncadd [#allocation5], %s32
      %s34 = sshll.u32 [#allocation4], 4
      %s35 = int_to_ptr.vmem [resolvable:$true] %s34
      %40 = dma.hbm_to_vmem [thread:$0]  %s2, 6144, %s35, [#allocation5], 64, 64, 4
    $region13: #{tpu_custom_call.1} parent=1 // pred_fallthru
      _
    // Predicated region
    $region14: #{tpu_custom_call.1} parent=1 // pred_check
      _
    $region15: #{tpu_custom_call.1} parent=1 // pred_check_branch
      %42 = sbr.rel (0) target = $region17
    $region16: #{tpu_custom_call.1} parent=1 // pred_region
      _
    $region17: #{tpu_custom_call.1} parent=1 // pred_fallthru
      _
    // Predicated region
    $region18: #{tpu_custom_call.1} parent=1 // pred_check
      _
    $region19: #{tpu_custom_call.1} parent=1 // pred_check_branch
      %44 = sbr.rel (0) target = $region21
    $region20: #{tpu_custom_call.1} parent=1 // pred_region
      _
    $region21: #{tpu_custom_call.1} parent=1 // pred_fallthru
      _
    // Predicated region
    $region22: #{tpu_custom_call.1} parent=1 // pred_check
      _
    $region23: #{tpu_custom_call.1} parent=1 // pred_check_branch
      %46 = sbr.rel (0) target = $region25
    $region24: #{tpu_custom_call.1} parent=1 // pred_region
      _
    $region25: #{tpu_custom_call.1} parent=1 // pred_fallthru
      _
    // Predicated region
    $region26: #{tpu_custom_call.1} parent=1 // pred_check
      _
    $region27: #{tpu_custom_call.1} parent=1 // pred_check_branch
      %48 = sbr.rel (0) target = $region29
    $region28: #{tpu_custom_call.1} parent=1 // pred_region
      %s50 = ssub.s32 1024, 1024
      %51 = vsyncadd [#allocation5], %s50
      %s52 = sshll.u32 [#allocation6], 4
      %s53 = int_to_ptr.vmem [resolvable:$true] %s52
      %58 = dma.hbm_to_vmem [thread:$0]  %s6, 1024, %s53, [#allocation5], 64, 64, 4
    $region29: #{tpu_custom_call.1} parent=1 // pred_fallthru
      _
    // Predicated region
    $region30: #{tpu_custom_call.1} parent=1 // pred_check
      _
    $region31: #{tpu_custom_call.1} parent=1 // pred_check_branch
      %60 = sbr.rel (0) target = $region33
    $region32: #{tpu_custom_call.1} parent=1 // pred_region
      _
    $region33: #{tpu_custom_call.1} parent=1 // pred_fallthru
      _
    // Predicated region
    $region34: #{tpu_custom_call.1} parent=1 // pred_check
      _
    $region35: #{tpu_custom_call.1} parent=1 // pred_check_branch
      %62 = sbr.rel (0) target = $region37
    $region36: #{tpu_custom_call.1} parent=1 // pred_region
      %63 = dma.done [#allocation3], 1536
    $region37: #{tpu_custom_call.1} parent=1 // pred_fallthru
      _
    // Predicated region
    $region38: #{tpu_custom_call.1} parent=1 // pred_check
      _
    $region39: #{tpu_custom_call.1} parent=1 // pred_check_branch
      %65 = sbr.rel (0) target = $region41
    $region40: #{tpu_custom_call.1} parent=1 // pred_region
      %66 = dma.done [#allocation5], 6144
    $region41: #{tpu_custom_call.1} parent=1 // pred_fallthru
      _
    // Predicated region
    $region42: #{tpu_custom_call.1} parent=1 // pred_check
      _
    $region43: #{tpu_custom_call.1} parent=1 // pred_check_branch
      %68 = sbr.rel (0) target = $region45
    $region44: #{tpu_custom_call.1} parent=1 // pred_region
      %69 = dma.done [#allocation5], 1024
    $region45: #{tpu_custom_call.1} parent=1 // pred_fallthru
      _
    %v71 = vld [vmem:[%s4] sm:$0xff]
    %v72 = vld [vmem:[#allocation2] sm:$0xff]
    %v73 = vld [vmem:[#allocation2 + $0x8] sm:$0xff]
    %v74 = vld [vmem:[#allocation2 + $0x10] sm:$0xff]
    %v75 = vld [vmem:[#allocation2 + $0x18] sm:$0xff]
    %v76 = vld [vmem:[#allocation2 + $0x20] sm:$0xff]
    %v77 = vld [vmem:[#allocation2 + $0x28] sm:$0xff]
    %v78 = vld [vmem:[#allocation2 + $0x30] sm:$0xff]
    %v79 = vld [vmem:[#allocation2 + $0x38] sm:$0xff]
    %v80 = vld [vmem:[#allocation2 + $0x40] sm:$0xff]
    %v81 = vld [vmem:[#allocation2 + $0x48] sm:$0xff]
    %v82 = vld [vmem:[#allocation2 + $0x50] sm:$0xff]
    %v83 = vld [vmem:[#allocation2 + $0x58] sm:$0xff]
    %v84 = vpack.c.bf16 %v78, %v72
    %v85 = vpack.c.bf16 %v79, %v73
    %v86 = vpack.c.bf16 %v80, %v74
    %v87 = vpack.c.bf16 %v81, %v75
    %v88 = vpack.c.bf16 %v82, %v76
    %v89 = vpack.c.bf16 %v83, %v77
    %v90 = vld [vmem:[#allocation4] sm:$0xf]
    %v91 = vld [vmem:[#allocation4 + $0x4] sm:$0xf]
    %v92 = vld [vmem:[#allocation4 + $0x8] sm:$0xf]
    %v93 = vld [vmem:[#allocation4 + $0xc] sm:$0xf]
    %v94 = vld [vmem:[#allocation4 + $0x10] sm:$0xf]
    %v95 = vld [vmem:[#allocation4 + $0x14] sm:$0xf]
    %v96 = vld [vmem:[#allocation4 + $0x18] sm:$0xf]
    %v97 = vld [vmem:[#allocation4 + $0x1c] sm:$0xf]
    %v98 = vld [vmem:[#allocation4 + $0x20] sm:$0xf]
    %v99 = vld [vmem:[#allocation4 + $0x24] sm:$0xf]
    %v100 = vld [vmem:[#allocation4 + $0x28] sm:$0xf]
    %v101 = vld [vmem:[#allocation4 + $0x2c] sm:$0xf]
    %v102 = vld [vmem:[#allocation4 + $0x30] sm:$0xf]
    %v103 = vld [vmem:[#allocation4 + $0x34] sm:$0xf]
    %v104 = vld [vmem:[#allocation4 + $0x38] sm:$0xf]
    %v105 = vld [vmem:[#allocation4 + $0x3c] sm:$0xf]
    %v106 = vld [vmem:[#allocation4 + $0x40] sm:$0xf]
    %v107 = vld [vmem:[#allocation4 + $0x44] sm:$0xf]
    %v108 = vld [vmem:[#allocation4 + $0x48] sm:$0xf]
    %v109 = vld [vmem:[#allocation4 + $0x4c] sm:$0xf]
    %v110 = vld [vmem:[#allocation4 + $0x50] sm:$0xf]
    %v111 = vld [vmem:[#allocation4 + $0x54] sm:$0xf]
    %v112 = vld [vmem:[#allocation4 + $0x58] sm:$0xf]
    %v113 = vld [vmem:[#allocation4 + $0x5c] sm:$0xf]
    %v114 = vld [vmem:[#allocation4 + $0x60] sm:$0xf]
    %v115 = vld [vmem:[#allocation4 + $0x64] sm:$0xf]
    %v116 = vld [vmem:[#allocation4 + $0x68] sm:$0xf]
    %v117 = vld [vmem:[#allocation4 + $0x6c] sm:$0xf]
    %v118 = vld [vmem:[#allocation4 + $0x70] sm:$0xf]
    %v119 = vld [vmem:[#allocation4 + $0x74] sm:$0xf]
    %v120 = vld [vmem:[#allocation4 + $0x78] sm:$0xf]
    %v121 = vld [vmem:[#allocation4 + $0x7c] sm:$0xf]
    %v122 = vld [vmem:[#allocation4 + $0x80] sm:$0xf]
    %v123 = vld [vmem:[#allocation4 + $0x84] sm:$0xf]
    %v124 = vld [vmem:[#allocation4 + $0x88] sm:$0xf]
    %v125 = vld [vmem:[#allocation4 + $0x8c] sm:$0xf]
    %v126 = vld [vmem:[#allocation4 + $0x90] sm:$0xf]
    %v127 = vld [vmem:[#allocation4 + $0x94] sm:$0xf]
    %v128 = vld [vmem:[#allocation4 + $0x98] sm:$0xf]
    %v129 = vld [vmem:[#allocation4 + $0x9c] sm:$0xf]
    %v130 = vld [vmem:[#allocation4 + $0xa0] sm:$0xf]
    %v131 = vld [vmem:[#allocation4 + $0xa4] sm:$0xf]
    %v132 = vld [vmem:[#allocation4 + $0xa8] sm:$0xf]
    %v133 = vld [vmem:[#allocation4 + $0xac] sm:$0xf]
    %v134 = vld [vmem:[#allocation4 + $0xb0] sm:$0xf]
    %v135 = vld [vmem:[#allocation4 + $0xb4] sm:$0xf]
    %v136 = vld [vmem:[#allocation4 + $0xb8] sm:$0xf]
    %v137 = vld [vmem:[#allocation4 + $0xbc] sm:$0xf]
    %v138 = vld [vmem:[#allocation4 + $0xc0] sm:$0xf]
    %v139 = vld [vmem:[#allocation4 + $0xc4] sm:$0xf]
    %v140 = vld [vmem:[#allocation4 + $0xc8] sm:$0xf]
    %v141 = vld [vmem:[#allocation4 + $0xcc] sm:$0xf]
    %v142 = vld [vmem:[#allocation4 + $0xd0] sm:$0xf]
    %v143 = vld [vmem:[#allocation4 + $0xd4] sm:$0xf]
    %v144 = vld [vmem:[#allocation4 + $0xd8] sm:$0xf]
    %v145 = vld [vmem:[#allocation4 + $0xdc] sm:$0xf]
    %v146 = vld [vmem:[#allocation4 + $0xe0] sm:$0xf]
    %v147 = vld [vmem:[#allocation4 + $0xe4] sm:$0xf]
    %v148 = vld [vmem:[#allocation4 + $0xe8] sm:$0xf]
    %v149 = vld [vmem:[#allocation4 + $0xec] sm:$0xf]
    %v150 = vld [vmem:[#allocation4 + $0xf0] sm:$0xf]
    %v151 = vld [vmem:[#allocation4 + $0xf4] sm:$0xf]
    %v152 = vld [vmem:[#allocation4 + $0xf8] sm:$0xf]
    %v153 = vld [vmem:[#allocation4 + $0xfc] sm:$0xf]
    %v154 = vld [vmem:[#allocation4 + $0x100] sm:$0xf]
    %v155 = vld [vmem:[#allocation4 + $0x104] sm:$0xf]
    %v156 = vld [vmem:[#allocation4 + $0x108] sm:$0xf]
    %v157 = vld [vmem:[#allocation4 + $0x10c] sm:$0xf]
    %v158 = vld [vmem:[#allocation4 + $0x110] sm:$0xf]
    %v159 = vld [vmem:[#allocation4 + $0x114] sm:$0xf]
    %v160 = vld [vmem:[#allocation4 + $0x118] sm:$0xf]
    %v161 = vld [vmem:[#allocation4 + $0x11c] sm:$0xf]
    %v162 = vld [vmem:[#allocation4 + $0x120] sm:$0xf]
    %v163 = vld [vmem:[#allocation4 + $0x124] sm:$0xf]
    %v164 = vld [vmem:[#allocation4 + $0x128] sm:$0xf]
    %v165 = vld [vmem:[#allocation4 + $0x12c] sm:$0xf]
    %v166 = vld [vmem:[#allocation4 + $0x130] sm:$0xf]
    %v167 = vld [vmem:[#allocation4 + $0x134] sm:$0xf]
    %v168 = vld [vmem:[#allocation4 + $0x138] sm:$0xf]
    %v169 = vld [vmem:[#allocation4 + $0x13c] sm:$0xf]
    %v170 = vld [vmem:[#allocation4 + $0x140] sm:$0xf]
    %v171 = vld [vmem:[#allocation4 + $0x144] sm:$0xf]
    %v172 = vld [vmem:[#allocation4 + $0x148] sm:$0xf]
    %v173 = vld [vmem:[#allocation4 + $0x14c] sm:$0xf]
    %v174 = vld [vmem:[#allocation4 + $0x150] sm:$0xf]
    %v175 = vld [vmem:[#allocation4 + $0x154] sm:$0xf]
    %v176 = vld [vmem:[#allocation4 + $0x158] sm:$0xf]
    %v177 = vld [vmem:[#allocation4 + $0x15c] sm:$0xf]
    %v178 = vld [vmem:[#allocation4 + $0x160] sm:$0xf]
    %v179 = vld [vmem:[#allocation4 + $0x164] sm:$0xf]
    %v180 = vld [vmem:[#allocation4 + $0x168] sm:$0xf]
    %v181 = vld [vmem:[#allocation4 + $0x16c] sm:$0xf]
    %v182 = vld [vmem:[#allocation4 + $0x170] sm:$0xf]
    %v183 = vld [vmem:[#allocation4 + $0x174] sm:$0xf]
    %v184 = vld [vmem:[#allocation4 + $0x178] sm:$0xf]
    %v185 = vld [vmem:[#allocation4 + $0x17c] sm:$0xf]
    %v186 = vld [vmem:[%s1] sm:$0xf]
    %v187 = vld [vmem:[%s1 + $0x4] sm:$0xf]
    %v188 = vld [vmem:[%s3] sm:$0xf]
    %v191 = vunpack.c.l.b16 %v186
    %v192 = vunpack.c.l.b16 %v187
    %v193 = vpack.c.b16 %v192, %v191
    %vm194 = vcmask 64512
    %v196 = vsel %vm194, %v193, 0
    %vm198 = vcmask 1043456
    %v200 = vsel %vm198, %v188, 0
    %202 = vmatprep.subr.bf16.mxu0 0
    %203 = vmatpush1.bf16.msra.mxu0 0
    %204 = vmatprep.subr.bf16.mxu0 0
    %205 = vmatpush1.bf16.msra.mxu0 0
    %206 = vmatprep.subr.bf16.mxu0 0
    %207 = vmatpush1.bf16.msra.mxu0 0
    %208 = vmatprep.subr.bf16.mxu0 0
    %209 = vmatpush1.bf16.msra.mxu0 0
    %210 = vmatprep.subr.bf16.mxu0 0
    %211 = vmatpush1.bf16.msra.mxu0 0
    %212 = vmatprep.subr.bf16.mxu0 0
    %213 = vmatpush1.bf16.msra.mxu0 0
    %214 = vmatprep.subr.bf16.mxu0 0
    %215 = vmatpush1.bf16.msra.mxu0 0
    %216 = vmatprep.subr.bf16.mxu0 0
    %217 = vmatpush1.bf16.msra.mxu0 %v200
    %218 = vmatprep.subr.bf16.mxu0 0
    %219 = vmatpush2.bf16.msra.mxu0 0
    %220 = vmatprep.subr.bf16.mxu0 0
    %221 = vmatpush2.bf16.msra.mxu0 0
    %222 = vmatprep.subr.bf16.mxu0 0
    %223 = vmatpush2.bf16.msra.mxu0 0
    %224 = vmatprep.subr.bf16.mxu0 0
    %225 = vmatpush2.bf16.msra.mxu0 0
    %226 = vmatprep.subr.bf16.mxu0 0
    %227 = vmatpush2.bf16.msra.mxu0 0
    %228 = vmatprep.subr.bf16.mxu0 0
    %229 = vmatpush2.bf16.msra.mxu0 0
    %230 = vmatprep.subr.bf16.mxu0 0
    %231 = vmatpush2.bf16.msra.mxu0 0
    %232 = vmatprep.subr.bf16.mxu0 0
    %233 = vmatpush2.bf16.msra.mxu0 0
    %234 = vmatprep.mubr.bf16.mxu0 0
    %235 = vmatmul.mubr.bf16.gmra.mxu0 %v196
    %v236 = vpop.f32.mrf.mxu0
    %v237 = vadd.f32 0.0, %v236
    %v238 = vpop.f32.mrf.mxu0
    %v239 = vpop.f32.mrf.mxu0
    %v240 = vadd.f32 0.0, %v239
    %v241 = vpop.f32.mrf.mxu0
    %242 = vdwg.mxu0
    %v339 = vunpack.c.l.b16 %v90
    %v340 = vunpack.c.l.b16 %v91
    %v341 = vunpack.c.l.b16 %v92
    %v342 = vunpack.c.l.b16 %v93
    %v343 = vunpack.c.l.b16 %v94
    %v344 = vunpack.c.l.b16 %v95
    %v345 = vunpack.c.l.b16 %v96
    %v346 = vunpack.c.l.b16 %v97
    %v347 = vunpack.c.l.b16 %v98
    %v348 = vunpack.c.l.b16 %v99
    %v349 = vunpack.c.l.b16 %v100
    %v350 = vunpack.c.l.b16 %v101
    %v351 = vunpack.c.l.b16 %v102
    %v352 = vunpack.c.l.b16 %v103
    %v353 = vunpack.c.l.b16 %v104
    %v354 = vunpack.c.l.b16 %v105
    %v355 = vunpack.c.l.b16 %v106
    %v356 = vunpack.c.l.b16 %v107
    %v357 = vunpack.c.l.b16 %v108
    %v358 = vunpack.c.l.b16 %v109
    %v359 = vunpack.c.l.b16 %v110
    %v360 = vunpack.c.l.b16 %v111
    %v361 = vunpack.c.l.b16 %v112
    %v362 = vunpack.c.l.b16 %v113
    %v363 = vunpack.c.l.b16 %v114
    %v364 = vunpack.c.l.b16 %v115
    %v365 = vunpack.c.l.b16 %v116
    %v366 = vunpack.c.l.b16 %v117
    %v367 = vunpack.c.l.b16 %v118
    %v368 = vunpack.c.l.b16 %v119
    %v369 = vunpack.c.l.b16 %v120
    %v370 = vunpack.c.l.b16 %v121
    %v371 = vunpack.c.l.b16 %v122
    %v372 = vunpack.c.l.b16 %v123
    %v373 = vunpack.c.l.b16 %v124
    %v374 = vunpack.c.l.b16 %v125
    %v375 = vunpack.c.l.b16 %v126
    %v376 = vunpack.c.l.b16 %v127
    %v377 = vunpack.c.l.b16 %v128
    %v378 = vunpack.c.l.b16 %v129
    %v379 = vunpack.c.l.b16 %v130
    %v380 = vunpack.c.l.b16 %v131
    %v381 = vunpack.c.l.b16 %v132
    %v382 = vunpack.c.l.b16 %v133
    %v383 = vunpack.c.l.b16 %v134
    %v384 = vunpack.c.l.b16 %v135
    %v385 = vunpack.c.l.b16 %v136
    %v386 = vunpack.c.l.b16 %v137
    %v387 = vunpack.c.l.b16 %v138
    %v388 = vunpack.c.l.b16 %v139
    %v389 = vunpack.c.l.b16 %v140
    %v390 = vunpack.c.l.b16 %v141
    %v391 = vunpack.c.l.b16 %v142
    %v392 = vunpack.c.l.b16 %v143
    %v393 = vunpack.c.l.b16 %v144
    %v394 = vunpack.c.l.b16 %v145
    %v395 = vunpack.c.l.b16 %v146
    %v396 = vunpack.c.l.b16 %v147
    %v397 = vunpack.c.l.b16 %v148
    %v398 = vunpack.c.l.b16 %v149
    %v399 = vunpack.c.l.b16 %v150
    %v400 = vunpack.c.l.b16 %v151
    %v401 = vunpack.c.l.b16 %v152
    %v402 = vunpack.c.l.b16 %v153
    %v403 = vunpack.c.l.b16 %v154
    %v404 = vunpack.c.l.b16 %v155
    %v405 = vunpack.c.l.b16 %v156
    %v406 = vunpack.c.l.b16 %v157
    %v407 = vunpack.c.l.b16 %v158
    %v408 = vunpack.c.l.b16 %v159
    %v409 = vunpack.c.l.b16 %v160
    %v410 = vunpack.c.l.b16 %v161
    %v411 = vunpack.c.l.b16 %v162
    %v412 = vunpack.c.l.b16 %v163
    %v413 = vunpack.c.l.b16 %v164
    %v414 = vunpack.c.l.b16 %v165
    %v415 = vunpack.c.l.b16 %v166
    %v416 = vunpack.c.l.b16 %v167
    %v417 = vunpack.c.l.b16 %v168
    %v418 = vunpack.c.l.b16 %v169
    %v419 = vunpack.c.l.b16 %v170
    %v420 = vunpack.c.l.b16 %v171
    %v421 = vunpack.c.l.b16 %v172
    %v422 = vunpack.c.l.b16 %v173
    %v423 = vunpack.c.l.b16 %v174
    %v424 = vunpack.c.l.b16 %v175
    %v425 = vunpack.c.l.b16 %v176
    %v426 = vunpack.c.l.b16 %v177
    %v427 = vunpack.c.l.b16 %v178
    %v428 = vunpack.c.l.b16 %v179
    %v429 = vunpack.c.l.b16 %v180
    %v430 = vunpack.c.l.b16 %v181
    %v431 = vunpack.c.l.b16 %v182
    %v432 = vunpack.c.l.b16 %v183
    %v433 = vunpack.c.l.b16 %v184
    %v434 = vunpack.c.l.b16 %v185
    %v435 = vpack.c.b16 %v340, %v339
    %v436 = vpack.c.b16 %v342, %v341
    %v437 = vpack.c.b16 %v344, %v343
    %v438 = vpack.c.b16 %v346, %v345
    %v439 = vpack.c.b16 %v348, %v347
    %v440 = vpack.c.b16 %v350, %v349
    %v441 = vpack.c.b16 %v352, %v351
    %v442 = vpack.c.b16 %v354, %v353
    %v443 = vpack.c.b16 %v356, %v355
    %v444 = vpack.c.b16 %v358, %v357
    %v445 = vpack.c.b16 %v360, %v359
    %v446 = vpack.c.b16 %v362, %v361
    %v447 = vpack.c.b16 %v364, %v363
    %v448 = vpack.c.b16 %v366, %v365
    %v449 = vpack.c.b16 %v368, %v367
    %v450 = vpack.c.b16 %v370, %v369
    %v451 = vpack.c.b16 %v372, %v371
    %v452 = vpack.c.b16 %v374, %v373
    %v453 = vpack.c.b16 %v376, %v375
    %v454 = vpack.c.b16 %v378, %v377
    %v455 = vpack.c.b16 %v380, %v379
    %v456 = vpack.c.b16 %v382, %v381
    %v457 = vpack.c.b16 %v384, %v383
    %v458 = vpack.c.b16 %v386, %v385
    %v459 = vpack.c.b16 %v388, %v387
    %v460 = vpack.c.b16 %v390, %v389
    %v461 = vpack.c.b16 %v392, %v391
    %v462 = vpack.c.b16 %v394, %v393
    %v463 = vpack.c.b16 %v396, %v395
    %v464 = vpack.c.b16 %v398, %v397
    %v465 = vpack.c.b16 %v400, %v399
    %v466 = vpack.c.b16 %v402, %v401
    %v467 = vpack.c.b16 %v404, %v403
    %v468 = vpack.c.b16 %v406, %v405
    %v469 = vpack.c.b16 %v408, %v407
    %v470 = vpack.c.b16 %v410, %v409
    %v471 = vpack.c.b16 %v412, %v411
    %v472 = vpack.c.b16 %v414, %v413
    %v473 = vpack.c.b16 %v416, %v415
    %v474 = vpack.c.b16 %v418, %v417
    %v475 = vpack.c.b16 %v420, %v419
    %v476 = vpack.c.b16 %v422, %v421
    %v477 = vpack.c.b16 %v424, %v423
    %v478 = vpack.c.b16 %v426, %v425
    %v479 = vpack.c.b16 %v428, %v427
    %v480 = vpack.c.b16 %v430, %v429
    %v481 = vpack.c.b16 %v432, %v431
    %v482 = vpack.c.b16 %v434, %v433
    %531 = vmatprep.subr.bf16.mxu0 0
    %532 = vmatpush1.bf16.msra.mxu0 %v442
    %533 = vmatprep.subr.bf16.mxu0 0
    %534 = vmatpush1.bf16.msra.mxu0 %v441
    %535 = vmatprep.subr.bf16.mxu0 0
    %536 = vmatpush1.bf16.msra.mxu0 %v440
    %537 = vmatprep.subr.bf16.mxu0 0
    %538 = vmatpush1.bf16.msra.mxu0 %v439
    %539 = vmatprep.subr.bf16.mxu0 0
    %540 = vmatpush1.bf16.msra.mxu0 %v438
    %541 = vmatprep.subr.bf16.mxu0 0
    %542 = vmatpush1.bf16.msra.mxu0 %v437
    %543 = vmatprep.subr.bf16.mxu0 0
    %544 = vmatpush1.bf16.msra.mxu0 %v436
    %545 = vmatprep.subr.bf16.mxu0 0
    %546 = vmatpush1.bf16.msra.mxu0 %v435
    %547 = vmatprep.subr.bf16.mxu0 0
    %548 = vmatpush2.bf16.msra.mxu0 %v450
    %549 = vmatprep.subr.bf16.mxu0 0
    %550 = vmatpush2.bf16.msra.mxu0 %v449
    %551 = vmatprep.subr.bf16.mxu0 0
    %552 = vmatpush2.bf16.msra.mxu0 %v448
    %553 = vmatprep.subr.bf16.mxu0 0
    %554 = vmatpush2.bf16.msra.mxu0 %v447
    %555 = vmatprep.subr.bf16.mxu0 0
    %556 = vmatpush2.bf16.msra.mxu0 %v446
    %557 = vmatprep.subr.bf16.mxu0 0
    %558 = vmatpush2.bf16.msra.mxu0 %v445
    %559 = vmatprep.subr.bf16.mxu0 0
    %560 = vmatpush2.bf16.msra.mxu0 %v444
    %561 = vmatprep.subr.bf16.mxu0 0
    %562 = vmatpush2.bf16.msra.mxu0 %v443
    %563 = vmatprep.mubr.bf16.mxu0 %v85
    %564 = vmatmul.mubr.bf16.gmra.mxu0 %v84
    %v565 = vpop.f32.mrf.mxu0
    %v566 = vadd.f32 %v237, %v565
    %v567 = vpop.f32.mrf.mxu0
    %v568 = vpop.f32.mrf.mxu0
    %v569 = vadd.f32 %v240, %v568
    %v570 = vpop.f32.mrf.mxu0
    %571 = vdwg.mxu0
    %572 = vmatprep.subr.bf16.mxu0 0
    %573 = vmatpush1.bf16.msra.mxu0 %v458
    %574 = vmatprep.subr.bf16.mxu0 0
    %575 = vmatpush1.bf16.msra.mxu0 %v457
    %576 = vmatprep.subr.bf16.mxu0 0
    %577 = vmatpush1.bf16.msra.mxu0 %v456
    %578 = vmatprep.subr.bf16.mxu0 0
    %579 = vmatpush1.bf16.msra.mxu0 %v455
    %580 = vmatprep.subr.bf16.mxu0 0
    %581 = vmatpush1.bf16.msra.mxu0 %v454
    %582 = vmatprep.subr.bf16.mxu0 0
    %583 = vmatpush1.bf16.msra.mxu0 %v453
    %584 = vmatprep.subr.bf16.mxu0 0
    %585 = vmatpush1.bf16.msra.mxu0 %v452
    %586 = vmatprep.subr.bf16.mxu0 0
    %587 = vmatpush1.bf16.msra.mxu0 %v451
    %588 = vmatprep.subr.bf16.mxu0 0
    %589 = vmatpush2.bf16.msra.mxu0 %v466
    %590 = vmatprep.subr.bf16.mxu0 0
    %591 = vmatpush2.bf16.msra.mxu0 %v465
    %592 = vmatprep.subr.bf16.mxu0 0
    %593 = vmatpush2.bf16.msra.mxu0 %v464
    %594 = vmatprep.subr.bf16.mxu0 0
    %595 = vmatpush2.bf16.msra.mxu0 %v463
    %596 = vmatprep.subr.bf16.mxu0 0
    %597 = vmatpush2.bf16.msra.mxu0 %v462
    %598 = vmatprep.subr.bf16.mxu0 0
    %599 = vmatpush2.bf16.msra.mxu0 %v461
    %600 = vmatprep.subr.bf16.mxu0 0
    %601 = vmatpush2.bf16.msra.mxu0 %v460
    %602 = vmatprep.subr.bf16.mxu0 0
    %603 = vmatpush2.bf16.msra.mxu0 %v459
    %604 = vmatprep.mubr.bf16.mxu0 %v87
    %605 = vmatmul.mubr.bf16.gmra.mxu0 %v86
    %v606 = vpop.f32.mrf.mxu0
    %v607 = vadd.f32 %v566, %v606
    %v608 = vpop.f32.mrf.mxu0
    %v609 = vpop.f32.mrf.mxu0
    %v610 = vadd.f32 %v569, %v609
    %v611 = vpop.f32.mrf.mxu0
    %612 = vdwg.mxu0
    %613 = vmatprep.subr.bf16.mxu0 0
    %614 = vmatpush1.bf16.msra.mxu0 %v474
    %615 = vmatprep.subr.bf16.mxu0 0
    %616 = vmatpush1.bf16.msra.mxu0 %v473
    %617 = vmatprep.subr.bf16.mxu0 0
    %618 = vmatpush1.bf16.msra.mxu0 %v472
    %619 = vmatprep.subr.bf16.mxu0 0
    %620 = vmatpush1.bf16.msra.mxu0 %v471
    %621 = vmatprep.subr.bf16.mxu0 0
    %622 = vmatpush1.bf16.msra.mxu0 %v470
    %623 = vmatprep.subr.bf16.mxu0 0
    %624 = vmatpush1.bf16.msra.mxu0 %v469
    %625 = vmatprep.subr.bf16.mxu0 0
    %626 = vmatpush1.bf16.msra.mxu0 %v468
    %627 = vmatprep.subr.bf16.mxu0 0
    %628 = vmatpush1.bf16.msra.mxu0 %v467
    %629 = vmatprep.subr.bf16.mxu0 0
    %630 = vmatpush2.bf16.msra.mxu0 %v482
    %631 = vmatprep.subr.bf16.mxu0 0
    %632 = vmatpush2.bf16.msra.mxu0 %v481
    %633 = vmatprep.subr.bf16.mxu0 0
    %634 = vmatpush2.bf16.msra.mxu0 %v480
    %635 = vmatprep.subr.bf16.mxu0 0
    %636 = vmatpush2.bf16.msra.mxu0 %v479
    %637 = vmatprep.subr.bf16.mxu0 0
    %638 = vmatpush2.bf16.msra.mxu0 %v478
    %639 = vmatprep.subr.bf16.mxu0 0
    %640 = vmatpush2.bf16.msra.mxu0 %v477
    %641 = vmatprep.subr.bf16.mxu0 0
    %642 = vmatpush2.bf16.msra.mxu0 %v476
    %643 = vmatprep.subr.bf16.mxu0 0
    %644 = vmatpush2.bf16.msra.mxu0 %v475
    %645 = vmatprep.mubr.bf16.mxu0 %v89
    %646 = vmatmul.mubr.bf16.gmra.mxu0 %v88
    %v647 = vpop.f32.mrf.mxu0
    %v648 = vadd.f32 %v607, %v647
    %v649 = vpop.f32.mrf.mxu0
    %v650 = vpop.f32.mrf.mxu0
    %v651 = vadd.f32 %v610, %v650
    %v652 = vpop.f32.mrf.mxu0
    %653 = vdwg.mxu0
    %v654 = vmax.f32 %v648, 0.0
    %v655 = vmax.f32 %v651, 0.0
    %656 = vadd.xlane.f32.xlu0 %v654
    %v657 = vpop.xlane.xlu0 %656
    %658 = vadd.xlane.f32.xlu0 %v655
    %v659 = vpop.xlane.xlu0 %658
    %v660 = vrcp.pop 128.0
    %v661 = vmul.f32 %v657, %v660
    %v662 = vmul.f32 %v659, %v660
    %v663 = vsub.f32 %v654, %v661
    %v664 = vsub.f32 %v655, %v662
    %v665 = vmul.f32 %v663, %v663
    %v666 = vmul.f32 %v664, %v664
    %667 = vadd.xlane.f32.xlu0 %v665
    %v668 = vpop.xlane.xlu0 %667
    %669 = vadd.xlane.f32.xlu0 %v666
    %v670 = vpop.xlane.xlu0 %669
    %v671 = vmul.f32 %v668, %v660
    %v672 = vmul.f32 %v670, %v660
    %v673 = vadd.f32 %v671, 1e-05
    %v674 = vadd.f32 %v672, 1e-05
    %v675 = vrsqrt.pop %v673
    %v676 = vrsqrt.pop %v674
    %v677 = vmul.f32 %v663, %v675
    %v678 = vmul.f32 %v664, %v676
    %v679 = vlaneseq
    %v680 = vshrl.u32 %v679, 7
    %v681 = vsub.s32 0, %v680
    %v682 = vrot.slane %v71, %v681
    %v683 = vmul.f32 %v677, %v682
    %v684 = vmul.f32 %v678, %v682
    %v685 = vlaneseq
    %v686 = vshrl.u32 %v685, 7
    %v687 = vsub.s32 1, %v686
    %v688 = vrot.slane %v71, %v687
    %v689 = vadd.f32 %v683, %v688
    %v690 = vadd.f32 %v684, %v688
    %v691 = vpack.c.bf16 %v690, %v689
    %v692 = vld [vmem:[%s5] sm:$0xf]
    %v693 = vld [vmem:[%s5 + $0x4] sm:$0xf]
    %v694 = vld [vmem:[%s5 + $0x8] sm:$0xf]
    %v695 = vld [vmem:[%s5 + $0xc] sm:$0xf]
    %v696 = vld [vmem:[%s5 + $0x10] sm:$0xf]
    %v697 = vld [vmem:[%s5 + $0x14] sm:$0xf]
    %v698 = vld [vmem:[%s5 + $0x18] sm:$0xf]
    %v699 = vld [vmem:[%s5 + $0x1c] sm:$0xf]
    %v700 = vld [vmem:[%s5 + $0x20] sm:$0xf]
    %v701 = vld [vmem:[%s5 + $0x24] sm:$0xf]
    %v702 = vld [vmem:[%s5 + $0x28] sm:$0xf]
    %v703 = vld [vmem:[%s5 + $0x2c] sm:$0xf]
    %v704 = vld [vmem:[%s5 + $0x30] sm:$0xf]
    %v705 = vld [vmem:[%s5 + $0x34] sm:$0xf]
    %v706 = vld [vmem:[%s5 + $0x38] sm:$0xf]
    %v707 = vld [vmem:[%s5 + $0x3c] sm:$0xf]
    %v708 = vlaneseq
    %v709 = vshrl.u32 %v708, 7
    %v710 = vsub.s32 2, %v709
    %v711 = vrot.slane %v71, %v710
    %v728 = vunpack.c.l.b16 %v692
    %v729 = vunpack.c.l.b16 %v693
    %v730 = vunpack.c.l.b16 %v694
    %v731 = vunpack.c.l.b16 %v695
    %v732 = vunpack.c.l.b16 %v696
    %v733 = vunpack.c.l.b16 %v697
    %v734 = vunpack.c.l.b16 %v698
    %v735 = vunpack.c.l.b16 %v699
    %v736 = vunpack.c.l.b16 %v700
    %v737 = vunpack.c.l.b16 %v701
    %v738 = vunpack.c.l.b16 %v702
    %v739 = vunpack.c.l.b16 %v703
    %v740 = vunpack.c.l.b16 %v704
    %v741 = vunpack.c.l.b16 %v705
    %v742 = vunpack.c.l.b16 %v706
    %v743 = vunpack.c.l.b16 %v707
    %v744 = vpack.c.b16 %v729, %v728
    %v745 = vpack.c.b16 %v731, %v730
    %v746 = vpack.c.b16 %v733, %v732
    %v747 = vpack.c.b16 %v735, %v734
    %v748 = vpack.c.b16 %v737, %v736
    %v749 = vpack.c.b16 %v739, %v738
    %v750 = vpack.c.b16 %v741, %v740
    %v751 = vpack.c.b16 %v743, %v742
    %760 = vmatprep.subr.bf16.mxu0 0
    %761 = vmatpush1.bf16.msra.mxu0 %v751
    %762 = vmatprep.subr.bf16.mxu0 0
    %763 = vmatpush1.bf16.msra.mxu0 %v750
    %764 = vmatprep.subr.bf16.mxu0 0
    %765 = vmatpush1.bf16.msra.mxu0 %v749
    %766 = vmatprep.subr.bf16.mxu0 0
    %767 = vmatpush1.bf16.msra.mxu0 %v748
    %768 = vmatprep.subr.bf16.mxu0 0
    %769 = vmatpush1.bf16.msra.mxu0 %v747
    %770 = vmatprep.subr.bf16.mxu0 0
    %771 = vmatpush1.bf16.msra.mxu0 %v746
    %772 = vmatprep.subr.bf16.mxu0 0
    %773 = vmatpush1.bf16.msra.mxu0 %v745
    %774 = vmatprep.subr.bf16.mxu0 0
    %775 = vmatpush1.bf16.msra.mxu0 %v744
    %776 = vmatprep.subr.bf16.mxu0 0
    %777 = vmatpush2.bf16.msra.mxu0 0
    %778 = vmatprep.subr.bf16.mxu0 0
    %779 = vmatpush2.bf16.msra.mxu0 0
    %780 = vmatprep.subr.bf16.mxu0 0
    %781 = vmatpush2.bf16.msra.mxu0 0
    %782 = vmatprep.subr.bf16.mxu0 0
    %783 = vmatpush2.bf16.msra.mxu0 0
    %784 = vmatprep.subr.bf16.mxu0 0
    %785 = vmatpush2.bf16.msra.mxu0 0
    %786 = vmatprep.subr.bf16.mxu0 0
    %787 = vmatpush2.bf16.msra.mxu0 0
    %788 = vmatprep.subr.bf16.mxu0 0
    %789 = vmatpush2.bf16.msra.mxu0 0
    %790 = vmatprep.subr.bf16.mxu0 0
    %791 = vmatpush2.bf16.msra.mxu0 0
    %792 = vmatprep.mubr.bf16.mxu0 0
    %793 = vmatmul.mubr.bf16.gmra.mxu0 %v691
    %v794 = vpop.f32.mrf.mxu0
    %v795 = vadd.f32 %v711, %v794
    %v796 = vpop.f32.mrf.mxu0
    %v797 = vpop.f32.mrf.mxu0
    %v798 = vadd.f32 %v711, %v797
    %v799 = vpop.f32.mrf.mxu0
    %800 = vdwg.mxu0
    %v801 = vmax.f32 %v795, 0.0
    %v802 = vmax.f32 %v798, 0.0
    %v803 = vpack.c.bf16 %v802, %v801
    %v804 = vld [vmem:[#allocation6] sm:$0xf]
    %v805 = vld [vmem:[#allocation6 + $0x4] sm:$0xf]
    %v806 = vld [vmem:[#allocation6 + $0x8] sm:$0xf]
    %v807 = vld [vmem:[#allocation6 + $0xc] sm:$0xf]
    %v808 = vld [vmem:[#allocation6 + $0x10] sm:$0xf]
    %v809 = vld [vmem:[#allocation6 + $0x14] sm:$0xf]
    %v810 = vld [vmem:[#allocation6 + $0x18] sm:$0xf]
    %v811 = vld [vmem:[#allocation6 + $0x1c] sm:$0xf]
    %v812 = vld [vmem:[#allocation6 + $0x20] sm:$0xf]
    %v813 = vld [vmem:[#allocation6 + $0x24] sm:$0xf]
    %v814 = vld [vmem:[#allocation6 + $0x28] sm:$0xf]
    %v815 = vld [vmem:[#allocation6 + $0x2c] sm:$0xf]
    %v816 = vld [vmem:[#allocation6 + $0x30] sm:$0xf]
    %v817 = vld [vmem:[#allocation6 + $0x34] sm:$0xf]
    %v818 = vld [vmem:[#allocation6 + $0x38] sm:$0xf]
    %v819 = vld [vmem:[#allocation6 + $0x3c] sm:$0xf]
    %v836 = vunpack.c.l.b16 %v804
    %v837 = vunpack.c.l.b16 %v805
    %v838 = vunpack.c.l.b16 %v806
    %v839 = vunpack.c.l.b16 %v807
    %v840 = vunpack.c.l.b16 %v808
    %v841 = vunpack.c.l.b16 %v809
    %v842 = vunpack.c.l.b16 %v810
    %v843 = vunpack.c.l.b16 %v811
    %v844 = vunpack.c.l.b16 %v812
    %v845 = vunpack.c.l.b16 %v813
    %v846 = vunpack.c.l.b16 %v814
    %v847 = vunpack.c.l.b16 %v815
    %v848 = vunpack.c.l.b16 %v816
    %v849 = vunpack.c.l.b16 %v817
    %v850 = vunpack.c.l.b16 %v818
    %v851 = vunpack.c.l.b16 %v819
    %v852 = vpack.c.b16 %v837, %v836
    %v853 = vpack.c.b16 %v839, %v838
    %v854 = vpack.c.b16 %v841, %v840
    %v855 = vpack.c.b16 %v843, %v842
    %v856 = vpack.c.b16 %v845, %v844
    %v857 = vpack.c.b16 %v847, %v846
    %v858 = vpack.c.b16 %v849, %v848
    %v859 = vpack.c.b16 %v851, %v850
    %868 = vmatprep.subr.bf16.mxu0 0
    %869 = vmatpush1.bf16.msra.mxu0 %v859
    %870 = vmatprep.subr.bf16.mxu0 0
    %871 = vmatpush1.bf16.msra.mxu0 %v858
    %872 = vmatprep.subr.bf16.mxu0 0
    %873 = vmatpush1.bf16.msra.mxu0 %v857
    %874 = vmatprep.subr.bf16.mxu0 0
    %875 = vmatpush1.bf16.msra.mxu0 %v856
    %876 = vmatprep.subr.bf16.mxu0 0
    %877 = vmatpush1.bf16.msra.mxu0 %v855
    %878 = vmatprep.subr.bf16.mxu0 0
    %879 = vmatpush1.bf16.msra.mxu0 %v854
    %880 = vmatprep.subr.bf16.mxu0 0
    %881 = vmatpush1.bf16.msra.mxu0 %v853
    %882 = vmatprep.subr.bf16.mxu0 0
    %883 = vmatpush1.bf16.msra.mxu0 %v852
    %884 = vmatprep.subr.bf16.mxu0 0
    %885 = vmatpush2.bf16.msra.mxu0 0
    %886 = vmatprep.subr.bf16.mxu0 0
    %887 = vmatpush2.bf16.msra.mxu0 0
    %888 = vmatprep.subr.bf16.mxu0 0
    %889 = vmatpush2.bf16.msra.mxu0 0
    %890 = vmatprep.subr.bf16.mxu0 0
    %891 = vmatpush2.bf16.msra.mxu0 0
    %892 = vmatprep.subr.bf16.mxu0 0
    %893 = vmatpush2.bf16.msra.mxu0 0
    %894 = vmatprep.subr.bf16.mxu0 0
    %895 = vmatpush2.bf16.msra.mxu0 0
    %896 = vmatprep.subr.bf16.mxu0 0
    %897 = vmatpush2.bf16.msra.mxu0 0
    %898 = vmatprep.subr.bf16.mxu0 0
    %899 = vmatpush2.bf16.msra.mxu0 0
    %900 = vmatprep.mubr.bf16.mxu0 0
    %901 = vmatmul.mubr.bf16.gmra.mxu0 %v803
    %v902 = vpop.f32.mrf.mxu0
    %v903 = vadd.f32 0.0, %v902
    %v904 = vpop.f32.mrf.mxu0
    %v905 = vpop.f32.mrf.mxu0
    %v906 = vadd.f32 0.0, %v905
    %v907 = vpop.f32.mrf.mxu0
    %908 = vdwg.mxu0
    %v909 = vsub.f32 %v801, %v903
    %v910 = vsub.f32 %v802, %v906
    %v911 = vmul.f32 %v909, %v909
    %v912 = vmul.f32 %v910, %v910
    %v913 = vpack.c.bf16 %v912, %v911
    %914 = vmatprep.subr.bf16.mxu0 0
    %915 = vmatpush1.bf16.msra.mxu0 %v859
    %916 = vmatprep.subr.bf16.mxu0 0
    %917 = vmatpush1.bf16.msra.mxu0 %v858
    %918 = vmatprep.subr.bf16.mxu0 0
    %919 = vmatpush1.bf16.msra.mxu0 %v857
    %920 = vmatprep.subr.bf16.mxu0 0
    %921 = vmatpush1.bf16.msra.mxu0 %v856
    %922 = vmatprep.subr.bf16.mxu0 0
    %923 = vmatpush1.bf16.msra.mxu0 %v855
    %924 = vmatprep.subr.bf16.mxu0 0
    %925 = vmatpush1.bf16.msra.mxu0 %v854
    %926 = vmatprep.subr.bf16.mxu0 0
    %927 = vmatpush1.bf16.msra.mxu0 %v853
    %928 = vmatprep.subr.bf16.mxu0 0
    %929 = vmatpush1.bf16.msra.mxu0 %v852
    %930 = vmatprep.subr.bf16.mxu0 0
    %931 = vmatpush2.bf16.msra.mxu0 0
    %932 = vmatprep.subr.bf16.mxu0 0
    %933 = vmatpush2.bf16.msra.mxu0 0
    %934 = vmatprep.subr.bf16.mxu0 0
    %935 = vmatpush2.bf16.msra.mxu0 0
    %936 = vmatprep.subr.bf16.mxu0 0
    %937 = vmatpush2.bf16.msra.mxu0 0
    %938 = vmatprep.subr.bf16.mxu0 0
    %939 = vmatpush2.bf16.msra.mxu0 0
    %940 = vmatprep.subr.bf16.mxu0 0
    %941 = vmatpush2.bf16.msra.mxu0 0
    %942 = vmatprep.subr.bf16.mxu0 0
    %943 = vmatpush2.bf16.msra.mxu0 0
    %944 = vmatprep.subr.bf16.mxu0 0
    %945 = vmatpush2.bf16.msra.mxu0 0
    %946 = vmatprep.mubr.bf16.mxu0 0
    %947 = vmatmul.mubr.bf16.gmra.mxu0 %v913
    %v948 = vpop.f32.mrf.mxu0
    %v949 = vadd.f32 1e-05, %v948
    %v950 = vpop.f32.mrf.mxu0
    %v951 = vpop.f32.mrf.mxu0
    %v952 = vadd.f32 1e-05, %v951
    %v953 = vpop.f32.mrf.mxu0
    %954 = vdwg.mxu0
    %v955 = vrsqrt.pop %v949
    %v956 = vrsqrt.pop %v952
    %v957 = vmul.f32 %v909, %v955
    %v958 = vmul.f32 %v910, %v956
    %v959 = vlaneseq
    %v960 = vshrl.u32 %v959, 7
    %v961 = vsub.s32 3, %v960
    %v962 = vrot.slane %v71, %v961
    %v963 = vmul.f32 %v957, %v962
    %v964 = vmul.f32 %v958, %v962
    %v965 = vlaneseq
    %v966 = vshrl.u32 %v965, 7
    %v967 = vsub.s32 4, %v966
    %v968 = vrot.slane %v71, %v967
    %v969 = vadd.f32 %v963, %v968
    %v970 = vadd.f32 %v964, %v968
    %v971 = vpack.c.bf16 %v970, %v969
    %v972 = vld [vmem:[%s7] sm:$0xf]
    %v973 = vld [vmem:[%s7 + $0x4] sm:$0xf]
    %v974 = vld [vmem:[%s7 + $0x8] sm:$0xf]
    %v975 = vld [vmem:[%s7 + $0xc] sm:$0xf]
    %v976 = vld [vmem:[%s7 + $0x10] sm:$0xf]
    %v977 = vld [vmem:[%s7 + $0x14] sm:$0xf]
    %v978 = vld [vmem:[%s7 + $0x18] sm:$0xf]
    %v979 = vld [vmem:[%s7 + $0x1c] sm:$0xf]
    %v980 = vld [vmem:[%s7 + $0x20] sm:$0xf]
    %v981 = vld [vmem:[%s7 + $0x24] sm:$0xf]
    %v982 = vld [vmem:[%s7 + $0x28] sm:$0xf]
    %v983 = vld [vmem:[%s7 + $0x2c] sm:$0xf]
    %v984 = vld [vmem:[%s7 + $0x30] sm:$0xf]
    %v985 = vld [vmem:[%s7 + $0x34] sm:$0xf]
    %v986 = vld [vmem:[%s7 + $0x38] sm:$0xf]
    %v987 = vld [vmem:[%s7 + $0x3c] sm:$0xf]
    %v988 = vlaneseq
    %v989 = vshrl.u32 %v988, 7
    %v990 = vsub.s32 5, %v989
    %v991 = vrot.slane %v71, %v990
    %v1008 = vunpack.c.l.b16 %v972
    %v1009 = vunpack.c.l.b16 %v973
    %v1010 = vunpack.c.l.b16 %v974
    %v1011 = vunpack.c.l.b16 %v975
    %v1012 = vunpack.c.l.b16 %v976
    %v1013 = vunpack.c.l.b16 %v977
    %v1014 = vunpack.c.l.b16 %v978
    %v1015 = vunpack.c.l.b16 %v979
    %v1016 = vunpack.c.l.b16 %v980
    %v1017 = vunpack.c.l.b16 %v981
    %v1018 = vunpack.c.l.b16 %v982
    %v1019 = vunpack.c.l.b16 %v983
    %v1020 = vunpack.c.l.b16 %v984
    %v1021 = vunpack.c.l.b16 %v985
    %v1022 = vunpack.c.l.b16 %v986
    %v1023 = vunpack.c.l.b16 %v987
    %v1024 = vpack.c.b16 %v1009, %v1008
    %v1025 = vpack.c.b16 %v1011, %v1010
    %v1026 = vpack.c.b16 %v1013, %v1012
    %v1027 = vpack.c.b16 %v1015, %v1014
    %v1028 = vpack.c.b16 %v1017, %v1016
    %v1029 = vpack.c.b16 %v1019, %v1018
    %v1030 = vpack.c.b16 %v1021, %v1020
    %v1031 = vpack.c.b16 %v1023, %v1022
    %1040 = vmatprep.subr.bf16.mxu0 0
    %1041 = vmatpush1.bf16.msra.mxu0 %v1031
    %1042 = vmatprep.subr.bf16.mxu0 0
    %1043 = vmatpush1.bf16.msra.mxu0 %v1030
    %1044 = vmatprep.subr.bf16.mxu0 0
    %1045 = vmatpush1.bf16.msra.mxu0 %v1029
    %1046 = vmatprep.subr.bf16.mxu0 0
    %1047 = vmatpush1.bf16.msra.mxu0 %v1028
    %1048 = vmatprep.subr.bf16.mxu0 0
    %1049 = vmatpush1.bf16.msra.mxu0 %v1027
    %1050 = vmatprep.subr.bf16.mxu0 0
    %1051 = vmatpush1.bf16.msra.mxu0 %v1026
    %1052 = vmatprep.subr.bf16.mxu0 0
    %1053 = vmatpush1.bf16.msra.mxu0 %v1025
    %1054 = vmatprep.subr.bf16.mxu0 0
    %1055 = vmatpush1.bf16.msra.mxu0 %v1024
    %1056 = vmatprep.subr.bf16.mxu0 0
    %1057 = vmatpush2.bf16.msra.mxu0 0
    %1058 = vmatprep.subr.bf16.mxu0 0
    %1059 = vmatpush2.bf16.msra.mxu0 0
    %1060 = vmatprep.subr.bf16.mxu0 0
    %1061 = vmatpush2.bf16.msra.mxu0 0
    %1062 = vmatprep.subr.bf16.mxu0 0
    %1063 = vmatpush2.bf16.msra.mxu0 0
    %1064 = vmatprep.subr.bf16.mxu0 0
    %1065 = vmatpush2.bf16.msra.mxu0 0
    %1066 = vmatprep.subr.bf16.mxu0 0
    %1067 = vmatpush2.bf16.msra.mxu0 0
    %1068 = vmatprep.subr.bf16.mxu0 0
    %1069 = vmatpush2.bf16.msra.mxu0 0
    %1070 = vmatprep.subr.bf16.mxu0 0
    %1071 = vmatpush2.bf16.msra.mxu0 0
    %1072 = vmatprep.mubr.bf16.mxu0 0
    %1073 = vmatmul.mubr.bf16.gmra.mxu0 %v971
    %v1074 = vpop.f32.mrf.mxu0
    %v1075 = vadd.f32 %v991, %v1074
    %v1076 = vpop.f32.mrf.mxu0
    %v1077 = vpop.f32.mrf.mxu0
    %v1078 = vadd.f32 %v991, %v1077
    %v1079 = vpop.f32.mrf.mxu0
    %1080 = vdwg.mxu0
    %v1081 = vlaneseq
    %v1082 = vand.u32 %v1081, 127
    %vm1083 = vcmp.lt.s32.totalorder %v1082, 4
    %v1084 = vsel %vm1083, %v1075, -inf
    %v1085 = vsel %vm1083, %v1078, -inf
    %v1086 = vsel %vm194, %v1084, -inf
    %1087 = vmax.xlane.f32.xlu0 %v1086
    %v1088 = vpop.xlane.xlu0 %1087
    %v1089 = vsel %vm194, %v1085, -inf
    %1090 = vmax.xlane.f32.xlu0 %v1089
    %v1091 = vpop.xlane.xlu0 %1090
    %v1092 = vsub.f32 %v1084, %v1088
    %v1093 = vsub.f32 %v1085, %v1091
    %v1094 = vmul.f32 %v1092, 1.442695
    %v1095 = vpow.pop %v1094
    %v1096 = vmul.f32 %v1093, 1.442695
    %v1097 = vpow.pop %v1096
    %v1098 = vsel %vm1083, %v1095, 0.0
    %v1099 = vsel %vm1083, %v1097, 0.0
    %v1100 = vsel %vm194, %v1098, 0.0
    %1101 = vadd.xlane.f32.xlu0 %v1100
    %v1102 = vpop.xlane.xlu0 %1101
    %v1103 = vsel %vm194, %v1099, 0.0
    %1104 = vadd.xlane.f32.xlu0 %v1103
    %v1105 = vpop.xlane.xlu0 %1104
    %v1106 = vrcp.pop %v1102
    %v1107 = vmul.f32 %v1098, %v1106
    %v1108 = vrcp.pop %v1105
    %v1109 = vmul.f32 %v1099, %v1108
    %vm1110 = vcmp.eq.s32.totalorder %v1082, 4
    %v1111 = vsel %vm1110, %v1075, 0.0
    %v1112 = vsel %vm1110, %v1078, 0.0
    %v1113 = vsel %vm1083, %v1107, %v1111
    %v1114 = vsel %vm1083, %v1109, %v1112
    %v1115 = vpack.c.bf16 %v1114, %v1113
    %v1117 = vunpack.c.l.b16 %v1115
    %v1118 = vunpack.c.h.b16 %v1115
    %v1119 = vpack.c.b16 %v1117, %v1117
    %v1120 = vpack.c.b16 %v1118, %v1118
    %vm1123 = vcmask 60416
    %1124 = vst.msk [vmem:[%s8] sm:$0xf] %vm1123, %v1119
    %1125 = vst.msk [vmem:[%s8 + $0x4] sm:$0xf] %vm1123, %v1120
    // Predicated region
    $region46: #{tpu_custom_call.1} parent=1 // pred_check
      _
    $region47: #{tpu_custom_call.1} parent=1 // pred_check_branch
      %1127 = sbr.rel (0) target = $region49
    $region48: #{tpu_custom_call.1} parent=1 // pred_region
      _
    $region49: #{tpu_custom_call.1} parent=1 // pred_fallthru
      _
    // Predicated region
    $region50: #{tpu_custom_call.1} parent=1 // pred_check
      _
    $region51: #{tpu_custom_call.1} parent=1 // pred_check_branch
      %1129 = sbr.rel (0) target = $region53
    $region52: #{tpu_custom_call.1} parent=1 // pred_region
      _
    $region53: #{tpu_custom_call.1} parent=1 // pred_fallthru
      _
    %1130 = vsyncpa [#allocation3], 1
    %1131 = vsyncpa [#allocation5], 1

</llo_original>
